<compile_context>
chip_gen: v7x
topology: tpu7x:2x2x1
jax: 0.10.0
libtpu: 0.0.40
codegen_flags: <defaults>
</compile_context>

<pallas_src>
import jax
import jax.numpy as jnp
from jax.experimental import pallas as pl
from jax.experimental.pallas import tpu as pltpu

SIZE_OBS = 13
NUM_ACTIONS = 9
SIZE_LAYERS = [32, 32]
LOG_STD = 0.0

LANE = 128                 # lane width: batch lives on this axis
TILE_B = 16384             # batch tile; ~10 MiB working set incl. double buffers
XLA_FALLBACK_BATCH = 256   # below this, a fused XLA dot chain beats kernel overhead
NUM_TC = 2                 # v7x TensorCores per chip; want >= this many grid steps


def _round_up(a, b):
    return (a + b - 1) // b * b


def actor_kernel(x_ref, w1_ref, b1_ref, w2_ref, b2_ref, w3_ref, b3_ref, mu_ref):
    # Feature-major: batch on lanes. bf16 operands on the MXU, f32 accumulation.
    x = x_ref[...].astype(jnp.bfloat16)                                  # (13, TB)
    h1 = jnp.dot(w1_ref[...].astype(jnp.bfloat16), x,
                 preferred_element_type=jnp.float32) + b1_ref[...]       # (32, TB)
    h1 = jnp.maximum(h1, 0.0).astype(jnp.bfloat16)                       # ReLU
    h2 = jnp.dot(w2_ref[...].astype(jnp.bfloat16), h1,
                 preferred_element_type=jnp.float32) + b2_ref[...]       # (32, TB)
    h2 = jnp.maximum(h2, 0.0).astype(jnp.bfloat16)                       # ReLU
    mu_ref[...] = jnp.dot(w3_ref[...].astype(jnp.bfloat16), h2,
                          preferred_element_type=jnp.float32) + b3_ref[...]  # (9, TB)


@jax.jit
def model_actor_forward_fm(xt, params):
    """Feature-major fast path: no boundary transposes / pads / slices.

    xt: (SIZE_OBS, B) float32 or bfloat16, batch on the lane axis.
    Returns (mu_t, std_t), both (NUM_ACTIONS, B) float32.
    """
    w1, b1, w2, b2, w3, b3, log_std = params
    batch = xt.shape[1]

    # Lane-aligned batch tile. Guarantee >= NUM_TC grid steps (v7x megacore)
    # whenever the batch is big enough; last block may be partial.
    b128 = _round_up(batch, LANE)
    if b128 >= NUM_TC * LANE:
        tile_b = min(TILE_B, _round_up(pl.cdiv(b128, NUM_TC), LANE))
    else:
        tile_b = b128
    grid = (pl.cdiv(batch, tile_b),)

    param_bytes = sum(int(p.size) * p.dtype.itemsize
                      for p in (w1, b1, w2, b2, w3, b3))
    flops = 2 * batch * (SIZE_OBS * SIZE_LAYERS[0]
                         + SIZE_LAYERS[0] * SIZE_LAYERS[1]
                         + SIZE_LAYERS[1] * NUM_ACTIONS)
    bytes_accessed = (batch * SIZE_OBS * xt.dtype.itemsize
                      + batch * NUM_ACTIONS * 4 + param_bytes)

    mu_t = pl.pallas_call(
        actor_kernel,
        out_shape=jax.ShapeDtypeStruct((NUM_ACTIONS, batch), jnp.float32),
        grid=grid,
        in_specs=[
            # Activations: tiled over batch (lane axis), auto double-buffered.
            pl.BlockSpec((SIZE_OBS, tile_b), lambda i: (0, i)),
            # Weights / biases: constant index_map -> VMEM-resident.
            pl.BlockSpec((SIZE_LAYERS[0], SIZE_OBS), lambda i: (0, 0)),
            pl.BlockSpec((SIZE_LAYERS[0], 1), lambda i: (0, 0)),
            pl.BlockSpec((SIZE_LAYERS[1], SIZE_LAYERS[0]), lambda i: (0, 0)),
            pl.BlockSpec((SIZE_LAYERS[1], 1), lambda i: (0, 0)),
            pl.BlockSpec((NUM_ACTIONS, SIZE_LAYERS[1]), lambda i: (0, 0)),
            pl.BlockSpec((NUM_ACTIONS, 1), lambda i: (0, 0)),
        ],
        out_specs=pl.BlockSpec((NUM_ACTIONS, tile_b), lambda i: (0, i)),
        compiler_params=pltpu.CompilerParams(
            dimension_semantics=("parallel",),
            vmem_limit_bytes=32 << 20,   # headroom over v5e's 16 MiB default
        ),
        cost_estimate=pl.CostEstimate(
            flops=flops, transcendentals=0, bytes_accessed=bytes_accessed),
    )(xt, w1, b1, w2, b2, w3, b3)

    std_t = jnp.broadcast_to(jnp.exp(log_std).T, mu_t.shape)
    return mu_t, std_t


def _actor_forward_xla(x, params):
    """Tiny-batch fallback: fused XLA dot chain, no kernel launch / layout passes."""
    w1, b1, w2, b2, w3, b3, log_std = params
    h1 = jnp.maximum(x @ w1.T + b1.T, 0.0)
    h2 = jnp.maximum(h1 @ w2.T + b2.T, 0.0)
    mu = h2 @ w3.T + b3.T
    std = jnp.broadcast_to(jnp.exp(log_std), mu.shape)
    return mu, std


@jax.jit
def model_actor_forward(x, params):
    """Batch-major public API matching the PyTorch module.

    x: (B, SIZE_OBS) float32.  Returns (mu, std), each (B, NUM_ACTIONS).
    Small batches skip Pallas entirely; large batches pay one transpose on each
    side of the feature-major kernel.  Throughput callers should adopt
    `model_actor_forward_fm` end-to-end to drop those boundary passes.
    """
    batch = x.shape[0]
    if batch < XLA_FALLBACK_BATCH:
        return _actor_forward_xla(x, params)
    mu_t, _ = model_actor_forward_fm(x.T, params)
    mu = mu_t.T
    log_std = params[6]
    std = jnp.broadcast_to(jnp.exp(log_std), mu.shape)
    return mu, std


def init_params(key):
    """Deterministic synthetic parameters.

    Weights stored as (out_features, in_features) — exactly nn.Linear layout.
    Biases stored as (out_features, 1) so they broadcast along the lane axis.
    """
    k1, k2, k3, k4, k5, k6 = jax.random.split(key, 6)
    w1 = jax.random.normal(k1, (SIZE_LAYERS[0], SIZE_OBS), jnp.float32) * 0.1
    b1 = jax.random.normal(k2, (SIZE_LAYERS[0], 1), jnp.float32) * 0.1
    w2 = jax.random.normal(k3, (SIZE_LAYERS[1], SIZE_LAYERS[0]), jnp.float32) * 0.1
    b2 = jax.random.normal(k4, (SIZE_LAYERS[1], 1), jnp.float32) * 0.1
    w3 = jax.random.normal(k5, (NUM_ACTIONS, SIZE_LAYERS[1]), jnp.float32) * 0.1
    b3 = jax.random.normal(k6, (NUM_ACTIONS, 1), jnp.float32) * 0.1
    log_std = jnp.ones((1, NUM_ACTIONS), jnp.float32) * LOG_STD
    return (w1, b1, w2, b2, w3, b3, log_std)


def reference_forward(x, params):
    w1, b1, w2, b2, w3, b3, log_std = params
    h1 = jnp.maximum(x @ w1.T + b1.T, 0.0)
    h2 = jnp.maximum(h1 @ w2.T + b2.T, 0.0)
    mu = h2 @ w3.T + b3.T
    std = jnp.broadcast_to(jnp.exp(log_std), mu.shape)
    return mu, std


if __name__ == "__main__":
    key = jax.random.PRNGKey(0)
    k_params, k_x1, k_x2 = jax.random.split(key, 3)
    params = init_params(k_params)

    # --- Pallas path, feature-major. Batch deliberately not a multiple of 128
    #     (and not of tile_b): exercises the partial-last-block handling. ---
    batch = 300
    x = jax.random.normal(k_x1, (batch, SIZE_OBS), jnp.float32)
    mu_t, std_t = jax.block_until_ready(model_actor_forward_fm(x.T, params))
    mu_ref, std_ref = reference_forward(x, params)
    assert mu_t.shape == (NUM_ACTIONS, batch) and std_t.shape == (NUM_ACTIONS, batch)
    # bf16 MXU operands (f32 accumulation) -> relaxed tolerance vs f32 reference.
    assert jnp.allclose(mu_t.T, mu_ref, atol=3e-2, rtol=3e-2)
    assert jnp.allclose(std_t.T, std_ref, atol=1e-6, rtol=1e-6)

    # --- Batch-major dispatcher, Pallas branch. ---
    mu, std = jax.block_until_ready(model_actor_forward(x, params))
    assert mu.shape == (batch, NUM_ACTIONS) and std.shape == (batch, NUM_ACTIONS)
    assert jnp.allclose(mu, mu_ref, atol=3e-2, rtol=3e-2)
    assert jnp.allclose(std, std_ref, atol=1e-6, rtol=1e-6)

    # --- Batch-major dispatcher, tiny-batch XLA fallback. ---
    batch_s = 8
    xs = jax.random.normal(k_x2, (batch_s, SIZE_OBS), jnp.float32)
    mu_s, std_s = jax.block_until_ready(model_actor_forward(xs, params))
    mu_s_ref, std_s_ref = reference_forward(xs, params)
    assert jnp.allclose(mu_s, mu_s_ref, atol=1e-5, rtol=1e-5)
    assert jnp.allclose(std_s, std_s_ref, atol=1e-6, rtol=1e-6)

    # TODO(synk): torch.distributions.Normal(mu, std) has no Pallas equivalent;
    # callers sample / evaluate log-probs from (mu, std) in plain JAX.
    print("KERNEL_OK")
</pallas_src>

<mosaic_0001>
module attributes {stable_mosaic.version = 11 : i64} {
  func.func @actor_kernel(%arg0: i32, %arg1: memref<13x256xf32, #tpu.memory_space<vmem>>, %arg2: memref<32x13xf32, #tpu.memory_space<vmem>>, %arg3: memref<32x1xf32, #tpu.memory_space<vmem>>, %arg4: memref<32x32xf32, #tpu.memory_space<vmem>>, %arg5: memref<32x1xf32, #tpu.memory_space<vmem>>, %arg6: memref<9x32xf32, #tpu.memory_space<vmem>>, %arg7: memref<9x1xf32, #tpu.memory_space<vmem>>, %arg8: memref<9x256xf32, #tpu.memory_space<vmem>>) attributes {dimension_semantics = [#tpu.dimension_semantics<parallel>], iteration_bounds = array<i64: 2>, scalar_prefetch = 0 : i64, scratch_operands = 0 : i64, tpu.core_type = #tpu.core_type<tc>, window_params = [{transform_indices = @transform_0, window_bounds = array<i64: 13, 256>}, {pipeline_mode = #tpu.pipeline_mode<synchronous>, transform_indices = @transform_1, window_bounds = array<i64: 32, 13>}, {pipeline_mode = #tpu.pipeline_mode<synchronous>, transform_indices = @transform_2, window_bounds = array<i64: 32, 1>}, {pipeline_mode = #tpu.pipeline_mode<synchronous>, transform_indices = @transform_3, window_bounds = array<i64: 32, 32>}, {pipeline_mode = #tpu.pipeline_mode<synchronous>, transform_indices = @transform_4, window_bounds = array<i64: 32, 1>}, {pipeline_mode = #tpu.pipeline_mode<synchronous>, transform_indices = @transform_5, window_bounds = array<i64: 9, 32>}, {pipeline_mode = #tpu.pipeline_mode<synchronous>, transform_indices = @transform_6, window_bounds = array<i64: 9, 1>}, {transform_indices = @transform_7, window_bounds = array<i64: 9, 256>}]} {
    %c0 = arith.constant 0 : index
    %c0_0 = arith.constant 0 : index
    %0 = vector.load %arg1[%c0, %c0_0] : memref<13x256xf32, #tpu.memory_space<vmem>>, vector<13x256xf32>
    %1 = arith.truncf %0 : vector<13x256xf32> to vector<13x256xbf16>
    %c0_1 = arith.constant 0 : index
    %c0_2 = arith.constant 0 : index
    %2 = vector.load %arg2[%c0_1, %c0_2] : memref<32x13xf32, #tpu.memory_space<vmem>>, vector<32x13xf32>
    %3 = arith.truncf %2 : vector<32x13xf32> to vector<32x13xbf16>
    %cst = arith.constant dense<0.000000e+00> : vector<32x256xf32>
    %4 = tpu.matmul %3, %1, %cst {dimension_numbers = #tpu.dot_dimension_numbers<[1], [0], [0], [1], [0, 0, 1, 1], [], []>} : vector<32x13xbf16>, vector<13x256xbf16>, vector<32x256xf32> -> vector<32x256xf32>
    %c0_3 = arith.constant 0 : index
    %c0_4 = arith.constant 0 : index
    %5 = vector.load %arg3[%c0_3, %c0_4] : memref<32x1xf32, #tpu.memory_space<vmem>>, vector<32x1xf32>
    %6 = vector.broadcast %5 : vector<32x1xf32> to vector<32x256xf32>
    %7 = arith.addf %4, %6 : vector<32x256xf32>
    %cst_5 = arith.constant 0.000000e+00 : f32
    %8 = vector.broadcast %cst_5 : f32 to vector<32x256xf32>
    %9 = arith.maximumf %7, %8 : vector<32x256xf32>
    %10 = arith.truncf %9 : vector<32x256xf32> to vector<32x256xbf16>
    %c0_6 = arith.constant 0 : index
    %c0_7 = arith.constant 0 : index
    %11 = vector.load %arg4[%c0_6, %c0_7] : memref<32x32xf32, #tpu.memory_space<vmem>>, vector<32x32xf32>
    %12 = arith.truncf %11 : vector<32x32xf32> to vector<32x32xbf16>
    %cst_8 = arith.constant dense<0.000000e+00> : vector<32x256xf32>
    %13 = tpu.matmul %12, %10, %cst_8 {dimension_numbers = #tpu.dot_dimension_numbers<[1], [0], [0], [1], [0, 0, 1, 1], [], []>} : vector<32x32xbf16>, vector<32x256xbf16>, vector<32x256xf32> -> vector<32x256xf32>
    %c0_9 = arith.constant 0 : index
    %c0_10 = arith.constant 0 : index
    %14 = vector.load %arg5[%c0_9, %c0_10] : memref<32x1xf32, #tpu.memory_space<vmem>>, vector<32x1xf32>
    %15 = vector.broadcast %14 : vector<32x1xf32> to vector<32x256xf32>
    %16 = arith.addf %13, %15 : vector<32x256xf32>
    %cst_11 = arith.constant 0.000000e+00 : f32
    %17 = vector.broadcast %cst_11 : f32 to vector<32x256xf32>
    %18 = arith.maximumf %16, %17 : vector<32x256xf32>
    %19 = arith.truncf %18 : vector<32x256xf32> to vector<32x256xbf16>
    %c0_12 = arith.constant 0 : index
    %c0_13 = arith.constant 0 : index
    %20 = vector.load %arg6[%c0_12, %c0_13] : memref<9x32xf32, #tpu.memory_space<vmem>>, vector<9x32xf32>
    %21 = arith.truncf %20 : vector<9x32xf32> to vector<9x32xbf16>
    %cst_14 = arith.constant dense<0.000000e+00> : vector<9x256xf32>
    %22 = tpu.matmul %21, %19, %cst_14 {dimension_numbers = #tpu.dot_dimension_numbers<[1], [0], [0], [1], [0, 0, 1, 1], [], []>} : vector<9x32xbf16>, vector<32x256xbf16>, vector<9x256xf32> -> vector<9x256xf32>
    %c0_15 = arith.constant 0 : index
    %c0_16 = arith.constant 0 : index
    %23 = vector.load %arg7[%c0_15, %c0_16] : memref<9x1xf32, #tpu.memory_space<vmem>>, vector<9x1xf32>
    %24 = vector.broadcast %23 : vector<9x1xf32> to vector<9x256xf32>
    %25 = arith.addf %22, %24 : vector<9x256xf32>
    %c0_17 = arith.constant 0 : index
    %c0_18 = arith.constant 0 : index
    %26 = vector.load %arg8[%c0_17, %c0_18] : memref<9x256xf32, #tpu.memory_space<vmem>>, vector<9x256xf32>
    tpu.vector_store %arg8[%c0_17, %c0_18], %25 {strides = array<i32>} : memref<9x256xf32, #tpu.memory_space<vmem>>, vector<9x256xf32>,
    return
  }
  func.func @transform_0(%arg0: i32) -> (i32, i32) {
    %c0_i32 = arith.constant 0 : i32
    %c0_i32_0 = arith.constant 0 : i32
    return %c0_i32, %arg0 : i32, i32
  }
  func.func @transform_1(%arg0: i32) -> (i32, i32) {
    %c0_i32 = arith.constant 0 : i32
    %c0_i32_0 = arith.constant 0 : i32
    %c0_i32_1 = arith.constant 0 : i32
    return %c0_i32, %c0_i32_0 : i32, i32
  }
  func.func @transform_2(%arg0: i32) -> (i32, i32) {
    %c0_i32 = arith.constant 0 : i32
    %c0_i32_0 = arith.constant 0 : i32
    %c0_i32_1 = arith.constant 0 : i32
    return %c0_i32, %c0_i32_0 : i32, i32
  }
  func.func @transform_3(%arg0: i32) -> (i32, i32) {
    %c0_i32 = arith.constant 0 : i32
    %c0_i32_0 = arith.constant 0 : i32
    %c0_i32_1 = arith.constant 0 : i32
    return %c0_i32, %c0_i32_0 : i32, i32
  }
  func.func @transform_4(%arg0: i32) -> (i32, i32) {
    %c0_i32 = arith.constant 0 : i32
    %c0_i32_0 = arith.constant 0 : i32
    %c0_i32_1 = arith.constant 0 : i32
    return %c0_i32, %c0_i32_0 : i32, i32
  }
  func.func @transform_5(%arg0: i32) -> (i32, i32) {
    %c0_i32 = arith.constant 0 : i32
    %c0_i32_0 = arith.constant 0 : i32
    %c0_i32_1 = arith.constant 0 : i32
    return %c0_i32, %c0_i32_0 : i32, i32
  }
  func.func @transform_6(%arg0: i32) -> (i32, i32) {
    %c0_i32 = arith.constant 0 : i32
    %c0_i32_0 = arith.constant 0 : i32
    %c0_i32_1 = arith.constant 0 : i32
    return %c0_i32, %c0_i32_0 : i32, i32
  }
  func.func @transform_7(%arg0: i32) -> (i32, i32) {
    %c0_i32 = arith.constant 0 : i32
    %c0_i32_0 = arith.constant 0 : i32
    return %c0_i32, %arg0 : i32, i32
  }
}

</mosaic_0001>

<llo_original>
// kernel: model_actor_forward_fm.1
$region0: #{model_actor_forward_fm.1}
  #allocation0 [shape = 'u32[]', space=smem, size = 0x4, offset = 0x4, fixed_abs, tag = 'smem constant byte address 0x4 - core index']
  #allocation1 [shape = 'u32[144,128]{1,0:T(1,128)}', space=vmem, size = 0x12000, scoped, tag = 'internal scratch']
  %s0 = inlined_call_operand.vmem [shape: f32[13,300], index: 0, kind: input, shape index: {}]
  %s1 = inlined_call_operand.vmem [shape: f32[32,13], index: 1, kind: input, shape index: {}]
  %s2 = inlined_call_operand.vmem [shape: f32[32,1], index: 2, kind: input, shape index: {}]
  %s3 = inlined_call_operand.vmem [shape: f32[32,32], index: 3, kind: input, shape index: {}]
  %s4 = inlined_call_operand.vmem [shape: f32[32,1], index: 4, kind: input, shape index: {}]
  %s5 = inlined_call_operand.vmem [shape: f32[9,32], index: 5, kind: input, shape index: {}]
  %s6 = inlined_call_operand.vmem [shape: f32[9,1], index: 6, kind: input, shape index: {}]
  %s7 = inlined_call_operand.hbm [shape: f32[9,300], index: 7, kind: output, shape index: {}]
  %s8 = sld [smem:[#allocation0]]
  $region127: #{model_actor_forward_fm.1} parent=0
    _
  %s10 = ssub.s32 1, %s8
  %s11 = scalar_select 0, %s10, %s8
  $region1: #{model_actor_forward_fm.1} parent=0
    #allocation2 [shape = 'u8[32768]{0}', space=vmem, size = 0x8000, scoped, tag = 'input window, operand 0']
    #allocation3 [shape = 'u8[32768]{0}', space=vmem, size = 0x8000, scoped, tag = 'output window, operand 0']
    #allocation4 [shape = 's32[2]{0}', space=sflag, size = 0x8, scoped, tag = 'scoped memory for model_actor_forward_fm.1']
    %12 = vsyncpa [#allocation4], 0
    %s13 = scalar_lea.sflag [#allocation4], 1
    %14 = vsyncpa %s13, 0
    loop: start=0, step=1, limit=4
    $region2: #{model_actor_forward_fm.1} parent=1 // loop_pre_header
      _
    $region3: #{model_actor_forward_fm.1} parent=1 // loop_header
      %s16 = sphi 0, %s20
      %p17 = scmp.ge.s32.totalorder %s16, 4
      %s26 = sphi 0, %s28
      %s29 = sphi 0, %s26
      %s30 = sphi 0, %s29
      %s46 = sphi 0, %s30
      %s50 = sphi 0, %s50
      %s52 = sphi 0, %s50
      %s53 = sphi 0, %s52
      %s67 = sphi 0, %s53
      %s71 = sphi 0, %s71
      %s73 = sphi 0, %s71
      %s74 = sphi 0, %s73
      %s88 = sphi 0, %s74
      %s92 = sphi 0, %s92
      %s94 = sphi 0, %s92
      %s95 = sphi 0, %s94
      %s109 = sphi 0, %s95
      %s113 = sphi 0, %s113
      %s115 = sphi 0, %s113
      %s116 = sphi 0, %s115
      %s130 = sphi 0, %s116
      %s134 = sphi 0, %s134
      %s136 = sphi 0, %s134
      %s137 = sphi 0, %s136
      %s151 = sphi 0, %s137
      %s155 = sphi 0, %s155
      %s157 = sphi 0, %s155
      %s158 = sphi 0, %s157
      %s172 = sphi 0, %s158
      %s178 = sphi 0, %s180
      %s181 = sphi 0, %s178
      %s182 = sphi 0, %s181
      %s198 = sphi 0, %s182
    $region4: #{model_actor_forward_fm.1} parent=1 // loop_header_branch
      %19 = sbr.rel (%p17) target = $region8
    $region5: #{model_actor_forward_fm.1} parent=1 // loop_body
      %s21 = ssub.s32 %s16, 1
      %s22 = ssub.s32 %s16, 2
      %s23 = sadd.s32 %s16, 1
      %s24 = ssub.s32 %s16, %s23
      %p25 = scmp.eq.s32.totalorder %s24, 0
      %s27 = sadd.s32 %s26, 1
      %s28 = scalar_select %p25, %s26, %s27
      %p31 = pneg %p25
      %p32 = scmp.eq.s32.totalorder %s16, 1
      %p33 = por %p31, %p32
      %p34 = scmp.ne.s32.totalorder %s26, %s29
      %p35 = scmp.eq.s32.totalorder %s16, 0
      %p36 = por %p34, %p35
      %p37 = scmp.ne.s32.totalorder %s26, %s29
      %p38 = scmp.eq.s32.totalorder %s21, 1
      %p39 = por %p37, %p38
      %p40 = scmp.ne.s32.totalorder %s29, %s30
      %p41 = scmp.eq.s32.totalorder %s21, 0
      %p42 = por %p40, %p41
      %p43 = scmp.ne.s32.totalorder %s29, %s30
      %p44 = scmp.eq.s32.totalorder %s22, 1
      %p45 = por %p43, %p44
      %p47 = scmp.ne.s32.totalorder %s30, %s46
      %p48 = scmp.eq.s32.totalorder %s22, 0
      %p49 = por %p47, %p48
      %s51 = sadd.s32 %s50, 1
      %p54 = scmp.eq.s32.totalorder %s16, 1
      %p55 = scmp.ne.s32.totalorder %s50, %s52
      %p56 = scmp.eq.s32.totalorder %s16, 0
      %p57 = por %p55, %p56
      %p58 = scmp.ne.s32.totalorder %s50, %s52
      %p59 = scmp.eq.s32.totalorder %s21, 1
      %p60 = por %p58, %p59
      %p61 = scmp.ne.s32.totalorder %s52, %s53
      %p62 = scmp.eq.s32.totalorder %s21, 0
      %p63 = por %p61, %p62
      %p64 = scmp.ne.s32.totalorder %s52, %s53
      %p65 = scmp.eq.s32.totalorder %s22, 1
      %p66 = por %p64, %p65
      %p68 = scmp.ne.s32.totalorder %s53, %s67
      %p69 = scmp.eq.s32.totalorder %s22, 0
      %p70 = por %p68, %p69
      %s72 = sadd.s32 %s71, 1
      %p75 = scmp.eq.s32.totalorder %s16, 1
      %p76 = scmp.ne.s32.totalorder %s71, %s73
      %p77 = scmp.eq.s32.totalorder %s16, 0
      %p78 = por %p76, %p77
      %p79 = scmp.ne.s32.totalorder %s71, %s73
      %p80 = scmp.eq.s32.totalorder %s21, 1
      %p81 = por %p79, %p80
      %p82 = scmp.ne.s32.totalorder %s73, %s74
      %p83 = scmp.eq.s32.totalorder %s21, 0
      %p84 = por %p82, %p83
      %p85 = scmp.ne.s32.totalorder %s73, %s74
      %p86 = scmp.eq.s32.totalorder %s22, 1
      %p87 = por %p85, %p86
      %p89 = scmp.ne.s32.totalorder %s74, %s88
      %p90 = scmp.eq.s32.totalorder %s22, 0
      %p91 = por %p89, %p90
      %s93 = sadd.s32 %s92, 1
      %p96 = scmp.eq.s32.totalorder %s16, 1
      %p97 = scmp.ne.s32.totalorder %s92, %s94
      %p98 = scmp.eq.s32.totalorder %s16, 0
      %p99 = por %p97, %p98
      %p100 = scmp.ne.s32.totalorder %s92, %s94
      %p101 = scmp.eq.s32.totalorder %s21, 1
      %p102 = por %p100, %p101
      %p103 = scmp.ne.s32.totalorder %s94, %s95
      %p104 = scmp.eq.s32.totalorder %s21, 0
      %p105 = por %p103, %p104
      %p106 = scmp.ne.s32.totalorder %s94, %s95
      %p107 = scmp.eq.s32.totalorder %s22, 1
      %p108 = por %p106, %p107
      %p110 = scmp.ne.s32.totalorder %s95, %s109
      %p111 = scmp.eq.s32.totalorder %s22, 0
      %p112 = por %p110, %p111
      %s114 = sadd.s32 %s113, 1
      %p117 = scmp.eq.s32.totalorder %s16, 1
      %p118 = scmp.ne.s32.totalorder %s113, %s115
      %p119 = scmp.eq.s32.totalorder %s16, 0
      %p120 = por %p118, %p119
      %p121 = scmp.ne.s32.totalorder %s113, %s115
      %p122 = scmp.eq.s32.totalorder %s21, 1
      %p123 = por %p121, %p122
      %p124 = scmp.ne.s32.totalorder %s115, %s116
      %p125 = scmp.eq.s32.totalorder %s21, 0
      %p126 = por %p124, %p125
      %p127 = scmp.ne.s32.totalorder %s115, %s116
      %p128 = scmp.eq.s32.totalorder %s22, 1
      %p129 = por %p127, %p128
      %p131 = scmp.ne.s32.totalorder %s116, %s130
      %p132 = scmp.eq.s32.totalorder %s22, 0
      %p133 = por %p131, %p132
      %s135 = sadd.s32 %s134, 1
      %p138 = scmp.eq.s32.totalorder %s16, 1
      %p139 = scmp.ne.s32.totalorder %s134, %s136
      %p140 = scmp.eq.s32.totalorder %s16, 0
      %p141 = por %p139, %p140
      %p142 = scmp.ne.s32.totalorder %s134, %s136
      %p143 = scmp.eq.s32.totalorder %s21, 1
      %p144 = por %p142, %p143
      %p145 = scmp.ne.s32.totalorder %s136, %s137
      %p146 = scmp.eq.s32.totalorder %s21, 0
      %p147 = por %p145, %p146
      %p148 = scmp.ne.s32.totalorder %s136, %s137
      %p149 = scmp.eq.s32.totalorder %s22, 1
      %p150 = por %p148, %p149
      %p152 = scmp.ne.s32.totalorder %s137, %s151
      %p153 = scmp.eq.s32.totalorder %s22, 0
      %p154 = por %p152, %p153
      %s156 = sadd.s32 %s155, 1
      %p159 = scmp.eq.s32.totalorder %s16, 1
      %p160 = scmp.ne.s32.totalorder %s155, %s157
      %p161 = scmp.eq.s32.totalorder %s16, 0
      %p162 = por %p160, %p161
      %p163 = scmp.ne.s32.totalorder %s155, %s157
      %p164 = scmp.eq.s32.totalorder %s21, 1
      %p165 = por %p163, %p164
      %p166 = scmp.ne.s32.totalorder %s157, %s158
      %p167 = scmp.eq.s32.totalorder %s21, 0
      %p168 = por %p166, %p167
      %p169 = scmp.ne.s32.totalorder %s157, %s158
      %p170 = scmp.eq.s32.totalorder %s22, 1
      %p171 = por %p169, %p170
      %p173 = scmp.ne.s32.totalorder %s158, %s172
      %p174 = scmp.eq.s32.totalorder %s22, 0
      %p175 = por %p173, %p174
      %s176 = ssub.s32 %s16, %s23
      %p177 = scmp.eq.s32.totalorder %s176, 0
      %s179 = sadd.s32 %s178, 1
      %s180 = scalar_select %p177, %s178, %s179
      %p183 = pneg %p177
      %p184 = scmp.eq.s32.totalorder %s16, 1
      %p185 = por %p183, %p184
      %p186 = scmp.ne.s32.totalorder %s178, %s181
      %p187 = scmp.eq.s32.totalorder %s16, 0
      %p188 = por %p186, %p187
      %p189 = scmp.ne.s32.totalorder %s178, %s181
      %p190 = scmp.eq.s32.totalorder %s21, 1
      %p191 = por %p189, %p190
      %p192 = scmp.ne.s32.totalorder %s181, %s182
      %p193 = scmp.eq.s32.totalorder %s21, 0
      %p194 = por %p192, %p193
      %p195 = scmp.ne.s32.totalorder %s181, %s182
      %p196 = scmp.eq.s32.totalorder %s22, 1
      %p197 = por %p195, %p196
      %p199 = scmp.ne.s32.totalorder %s182, %s198
      %p200 = scmp.eq.s32.totalorder %s22, 0
      %p201 = por %p199, %p200
      %p202 = scmp.le.s32.totalorder 1, %s16
      %p203 = scmp.lt.s32.totalorder %s16, 3
      %p204 = pnand %p202, %p203
      %p205 = pneg %p204
      // Predicated region
      $region9: #{model_actor_forward_fm.1} parent=5 // pred_check
        _
      $region10: #{model_actor_forward_fm.1} parent=5 // pred_check_branch
        %207 = sbr.rel (%p204) target = $region12
      $region11: #{model_actor_forward_fm.1} parent=5 // pred_region
        %s208 = ssub.s32 %s16, 1
        // Predicated region
        $region13: #{model_actor_forward_fm.1} parent=11 // pred_check
          %p209 = pneg %p63
        $region14: #{model_actor_forward_fm.1} parent=11 // pred_check_branch
          %211 = sbr.rel (%p209) target = $region16
        $region15: #{model_actor_forward_fm.1} parent=11 // pred_region
          _
        $region16: #{model_actor_forward_fm.1} parent=11 // pred_fallthru
          _
        // Predicated region
        $region17: #{model_actor_forward_fm.1} parent=11 // pred_check
          %p212 = pneg %p84
        $region18: #{model_actor_forward_fm.1} parent=11 // pred_check_branch
          %214 = sbr.rel (%p212) target = $region20
        $region19: #{model_actor_forward_fm.1} parent=11 // pred_region
          _
        $region20: #{model_actor_forward_fm.1} parent=11 // pred_fallthru
          _
        // Predicated region
        $region21: #{model_actor_forward_fm.1} parent=11 // pred_check
          %p215 = pneg %p105
        $region22: #{model_actor_forward_fm.1} parent=11 // pred_check_branch
          %217 = sbr.rel (%p215) target = $region24
        $region23: #{model_actor_forward_fm.1} parent=11 // pred_region
          _
        $region24: #{model_actor_forward_fm.1} parent=11 // pred_fallthru
          _
        // Predicated region
        $region25: #{model_actor_forward_fm.1} parent=11 // pred_check
          %p218 = pneg %p126
        $region26: #{model_actor_forward_fm.1} parent=11 // pred_check_branch
          %220 = sbr.rel (%p218) target = $region28
        $region27: #{model_actor_forward_fm.1} parent=11 // pred_region
          _
        $region28: #{model_actor_forward_fm.1} parent=11 // pred_fallthru
          _
        // Predicated region
        $region29: #{model_actor_forward_fm.1} parent=11 // pred_check
          %p221 = pneg %p147
        $region30: #{model_actor_forward_fm.1} parent=11 // pred_check_branch
          %223 = sbr.rel (%p221) target = $region32
        $region31: #{model_actor_forward_fm.1} parent=11 // pred_region
          _
        $region32: #{model_actor_forward_fm.1} parent=11 // pred_fallthru
          _
        // Predicated region
        $region33: #{model_actor_forward_fm.1} parent=11 // pred_check
          %p224 = pneg %p168
        $region34: #{model_actor_forward_fm.1} parent=11 // pred_check_branch
          %226 = sbr.rel (%p224) target = $region36
        $region35: #{model_actor_forward_fm.1} parent=11 // pred_region
          _
        $region36: #{model_actor_forward_fm.1} parent=11 // pred_fallthru
          _
      $region12: #{model_actor_forward_fm.1} parent=5 // pred_fallthru
        _
      %p227 = scmp.lt.s32.totalorder %s16, 2
      // Predicated region
      $region37: #{model_actor_forward_fm.1} parent=5 // pred_check
        %p228 = pneg %p227
      $region38: #{model_actor_forward_fm.1} parent=5 // pred_check_branch
        %230 = sbr.rel (%p228) target = $region40
      $region39: #{model_actor_forward_fm.1} parent=5 // pred_region
        // Predicated region
        $region41: #{model_actor_forward_fm.1} parent=39 // pred_check
          %p231 = pneg %p36
        $region42: #{model_actor_forward_fm.1} parent=39 // pred_check_branch
          %233 = sbr.rel (%p231) target = $region44
        $region43: #{model_actor_forward_fm.1} parent=39 // pred_region
          %s234 = sand.u32 %s26, 1
          %s235 = sand.u32 %s26, 1
          %s236 = smul.addr %s235, 32
          %s237 = scalar_lea.vmem [#allocation2], %s236
          %s238 = smul.u32 2, %s16
          %s239 = ssub.s32 3, %s238
          %p240 = scmp.lt.s32.totalorder %s239, 2
          %s241 = scalar_select %p240, %s239, 2
          %s242 = smul.u32 256, %s241
          %p243 = scmp.ne.s32.totalorder 0, %s242
          %s244 = smul.addr %s238, 8
          %s245 = scalar_lea.vmem %s0, %s244
          %s246 = smul.u32 %s241, 8
          // Predicated region
          $region45: #{model_actor_forward_fm.1} parent=43 // pred_check
            %p247 = pneg %p243
          $region46: #{model_actor_forward_fm.1} parent=43 // pred_check_branch
            %249 = sbr.rel (%p247) target = $region48
          $region47: #{model_actor_forward_fm.1} parent=43 // pred_region
            %p250 = scmp.lt.u32.totalorder %s246, 8
            %p251 = pneg %p250
            // Predicated region
            $region49: #{model_actor_forward_fm.1} parent=47 // pred_check
              _
            $region50: #{model_actor_forward_fm.1} parent=47 // pred_check_branch
              %253 = sbr.rel (%p250) target = $region52
            $region51: #{model_actor_forward_fm.1} parent=47 // pred_region
              %s270 = sand.u32 %s246, 7
              %p271 = scmp.eq.s32.totalorder %s270, 0
              // Predicated region
              $region64: #{model_actor_forward_fm.1} parent=51 // pred_check
                %p272 = pneg %p271
              $region65: #{model_actor_forward_fm.1} parent=51 // pred_check_branch
                %274 = sbr.rel (%p272) target = $region67
              $region66: #{model_actor_forward_fm.1} parent=51 // pred_region
                %s275 = sshrl.u32 %s246, 3
                %s276 = sshrl.u32 %s275, 5
                // While loop
                $region68: #{model_actor_forward_fm.1} parent=66 // loop_pre_header
                  _
                $region69: #{model_actor_forward_fm.1} parent=66 // loop_header
                  %s280 = sphi 0, %s282
                  %p281 = scmp.ge.s32.totalorder %s280, %s276
                  %s285 = sphi 0, %s418
                  %s286 = sphi %s245, %s421
                  %s287 = sphi %s237, %s422
                $region70: #{model_actor_forward_fm.1} parent=66 // loop_header_branch
                  %284 = sbr.rel (%p281) target = $region74
                $region71: #{model_actor_forward_fm.1} parent=66 // loop_body
                  %v288 = vld [vmem:[%s286] sm:$0xff]
                  %289 = vst [vmem:[%s287] sm:$0xff] %v288
                  %v290 = vld [vmem:[%s286 + $0x8] sm:$0xff]
                  %291 = vst [vmem:[%s287 + $0x8] sm:$0xff] %v290
                  %v292 = vld [vmem:[%s286 + $0x10] sm:$0xff]
                  %293 = vst [vmem:[%s287 + $0x10] sm:$0xff] %v292
                  %v294 = vld [vmem:[%s286 + $0x18] sm:$0xff]
                  %295 = vst [vmem:[%s287 + $0x18] sm:$0xff] %v294
                  %v296 = vld [vmem:[%s286 + $0x20] sm:$0xff]
                  %297 = vst [vmem:[%s287 + $0x20] sm:$0xff] %v296
                  %v298 = vld [vmem:[%s286 + $0x28] sm:$0xff]
                  %299 = vst [vmem:[%s287 + $0x28] sm:$0xff] %v298
                  %v300 = vld [vmem:[%s286 + $0x30] sm:$0xff]
                  %301 = vst [vmem:[%s287 + $0x30] sm:$0xff] %v300
                  %v302 = vld [vmem:[%s286 + $0x38] sm:$0xff]
                  %303 = vst [vmem:[%s287 + $0x38] sm:$0xff] %v302
                  %v304 = vld [vmem:[%s286 + $0x40] sm:$0xff]
                  %305 = vst [vmem:[%s287 + $0x40] sm:$0xff] %v304
                  %v306 = vld [vmem:[%s286 + $0x48] sm:$0xff]
                  %307 = vst [vmem:[%s287 + $0x48] sm:$0xff] %v306
                  %v308 = vld [vmem:[%s286 + $0x50] sm:$0xff]
                  %309 = vst [vmem:[%s287 + $0x50] sm:$0xff] %v308
                  %v310 = vld [vmem:[%s286 + $0x58] sm:$0xff]
                  %311 = vst [vmem:[%s287 + $0x58] sm:$0xff] %v310
                  %v312 = vld [vmem:[%s286 + $0x60] sm:$0xff]
                  %313 = vst [vmem:[%s287 + $0x60] sm:$0xff] %v312
                  %v314 = vld [vmem:[%s286 + $0x68] sm:$0xff]
                  %315 = vst [vmem:[%s287 + $0x68] sm:$0xff] %v314
                  %v316 = vld [vmem:[%s286 + $0x70] sm:$0xff]
                  %317 = vst [vmem:[%s287 + $0x70] sm:$0xff] %v316
                  %v318 = vld [vmem:[%s286 + $0x78] sm:$0xff]
                  %319 = vst [vmem:[%s287 + $0x78] sm:$0xff] %v318
                  %v320 = vld [vmem:[%s286 + $0x80] sm:$0xff]
                  %321 = vst [vmem:[%s287 + $0x80] sm:$0xff] %v320
                  %v322 = vld [vmem:[%s286 + $0x88] sm:$0xff]
                  %323 = vst [vmem:[%s287 + $0x88] sm:$0xff] %v322
                  %v324 = vld [vmem:[%s286 + $0x90] sm:$0xff]
                  %325 = vst [vmem:[%s287 + $0x90] sm:$0xff] %v324
                  %v326 = vld [vmem:[%s286 + $0x98] sm:$0xff]
                  %327 = vst [vmem:[%s287 + $0x98] sm:$0xff] %v326
                  %v328 = vld [vmem:[%s286 + $0xa0] sm:$0xff]
                  %329 = vst [vmem:[%s287 + $0xa0] sm:$0xff] %v328
                  %v330 = vld [vmem:[%s286 + $0xa8] sm:$0xff]
                  %331 = vst [vmem:[%s287 + $0xa8] sm:$0xff] %v330
                  %v332 = vld [vmem:[%s286 + $0xb0] sm:$0xff]
                  %333 = vst [vmem:[%s287 + $0xb0] sm:$0xff] %v332
                  %v334 = vld [vmem:[%s286 + $0xb8] sm:$0xff]
                  %335 = vst [vmem:[%s287 + $0xb8] sm:$0xff] %v334
                  %v336 = vld [vmem:[%s286 + $0xc0] sm:$0xff]
                  %337 = vst [vmem:[%s287 + $0xc0] sm:$0xff] %v336
                  %v338 = vld [vmem:[%s286 + $0xc8] sm:$0xff]
                  %339 = vst [vmem:[%s287 + $0xc8] sm:$0xff] %v338
                  %v340 = vld [vmem:[%s286 + $0xd0] sm:$0xff]
                  %341 = vst [vmem:[%s287 + $0xd0] sm:$0xff] %v340
                  %v342 = vld [vmem:[%s286 + $0xd8] sm:$0xff]
                  %343 = vst [vmem:[%s287 + $0xd8] sm:$0xff] %v342
                  %v344 = vld [vmem:[%s286 + $0xe0] sm:$0xff]
                  %345 = vst [vmem:[%s287 + $0xe0] sm:$0xff] %v344
                  %v346 = vld [vmem:[%s286 + $0xe8] sm:$0xff]
                  %347 = vst [vmem:[%s287 + $0xe8] sm:$0xff] %v346
                  %v348 = vld [vmem:[%s286 + $0xf0] sm:$0xff]
                  %349 = vst [vmem:[%s287 + $0xf0] sm:$0xff] %v348
                  %v350 = vld [vmem:[%s286 + $0xf8] sm:$0xff]
                  %351 = vst [vmem:[%s287 + $0xf8] sm:$0xff] %v350
                  %v352 = vld [vmem:[%s286 + $0x18] sm:$0xff]
                  %353 = vst [vmem:[%s287 + $0x10] sm:$0xff] %v352
                  %v354 = vld [vmem:[%s286 + $0x20] sm:$0xff]
                  %355 = vst [vmem:[%s287 + $0x18] sm:$0xff] %v354
                  %v356 = vld [vmem:[%s286 + $0x28] sm:$0xff]
                  %357 = vst [vmem:[%s287 + $0x20] sm:$0xff] %v356
                  %v358 = vld [vmem:[%s286 + $0x30] sm:$0xff]
                  %359 = vst [vmem:[%s287 + $0x28] sm:$0xff] %v358
                  %v360 = vld [vmem:[%s286 + $0x38] sm:$0xff]
                  %361 = vst [vmem:[%s287 + $0x30] sm:$0xff] %v360
                  %v362 = vld [vmem:[%s286 + $0x40] sm:$0xff]
                  %363 = vst [vmem:[%s287 + $0x38] sm:$0xff] %v362
                  %v364 = vld [vmem:[%s286 + $0x48] sm:$0xff]
                  %365 = vst [vmem:[%s287 + $0x40] sm:$0xff] %v364
                  %v366 = vld [vmem:[%s286 + $0x50] sm:$0xff]
                  %367 = vst [vmem:[%s287 + $0x48] sm:$0xff] %v366
                  %v368 = vld [vmem:[%s286 + $0x58] sm:$0xff]
                  %369 = vst [vmem:[%s287 + $0x50] sm:$0xff] %v368
                  %v370 = vld [vmem:[%s286 + $0x60] sm:$0xff]
                  %371 = vst [vmem:[%s287 + $0x58] sm:$0xff] %v370
                  %v372 = vld [vmem:[%s286 + $0x68] sm:$0xff]
                  %373 = vst [vmem:[%s287 + $0x60] sm:$0xff] %v372
                  %v374 = vld [vmem:[%s286 + $0x70] sm:$0xff]
                  %375 = vst [vmem:[%s287 + $0x68] sm:$0xff] %v374
                  %v376 = vld [vmem:[%s286 + $0x78] sm:$0xff]
                  %377 = vst [vmem:[%s287 + $0x70] sm:$0xff] %v376
                  %v378 = vld [vmem:[%s286 + $0x80] sm:$0xff]
                  %379 = vst [vmem:[%s287 + $0x78] sm:$0xff] %v378
                  %v380 = vld [vmem:[%s286 + $0x88] sm:$0xff]
                  %381 = vst [vmem:[%s287 + $0x80] sm:$0xff] %v380
                  %v382 = vld [vmem:[%s286 + $0x90] sm:$0xff]
                  %383 = vst [vmem:[%s287 + $0x88] sm:$0xff] %v382
                  %v384 = vld [vmem:[%s286 + $0x98] sm:$0xff]
                  %385 = vst [vmem:[%s287 + $0x90] sm:$0xff] %v384
                  %v386 = vld [vmem:[%s286 + $0xa0] sm:$0xff]
                  %387 = vst [vmem:[%s287 + $0x98] sm:$0xff] %v386
                  %v388 = vld [vmem:[%s286 + $0xa8] sm:$0xff]
                  %389 = vst [vmem:[%s287 + $0xa0] sm:$0xff] %v388
                  %v390 = vld [vmem:[%s286 + $0xb0] sm:$0xff]
                  %391 = vst [vmem:[%s287 + $0xa8] sm:$0xff] %v390
                  %v392 = vld [vmem:[%s286 + $0xb8] sm:$0xff]
                  %393 = vst [vmem:[%s287 + $0xb0] sm:$0xff] %v392
                  %v394 = vld [vmem:[%s286 + $0xc0] sm:$0xff]
                  %395 = vst [vmem:[%s287 + $0xb8] sm:$0xff] %v394
                  %v396 = vld [vmem:[%s286 + $0xc8] sm:$0xff]
                  %397 = vst [vmem:[%s287 + $0xc0] sm:$0xff] %v396
                  %v398 = vld [vmem:[%s286 + $0xd0] sm:$0xff]
                  %399 = vst [vmem:[%s287 + $0xc8] sm:$0xff] %v398
                  %v400 = vld [vmem:[%s286 + $0xd8] sm:$0xff]
                  %401 = vst [vmem:[%s287 + $0xd0] sm:$0xff] %v400
                  %v402 = vld [vmem:[%s286 + $0xe0] sm:$0xff]
                  %403 = vst [vmem:[%s287 + $0xd8] sm:$0xff] %v402
                  %v404 = vld [vmem:[%s286 + $0xe8] sm:$0xff]
                  %405 = vst [vmem:[%s287 + $0xe0] sm:$0xff] %v404
                  %v406 = vld [vmem:[%s286 + $0xf0] sm:$0xff]
                  %407 = vst [vmem:[%s287 + $0xe8] sm:$0xff] %v406
                  %v408 = vld [vmem:[%s286 + $0xf8] sm:$0xff]
                  %409 = vst [vmem:[%s287 + $0xf0] sm:$0xff] %v408
                  %v410 = vld [vmem:[%s286 + $0x100] sm:$0xff]
                  %411 = vst [vmem:[%s287 + $0xf8] sm:$0xff] %v410
                  %v412 = vld [vmem:[%s286 + $0x108] sm:$0xff]
                  %413 = vst [vmem:[%s287 + $0x100] sm:$0xff] %v412
                  %v414 = vld [vmem:[%s286 + $0x110] sm:$0xff]
                  %415 = vst [vmem:[%s287 + $0x108] sm:$0xff] %v414
                  %s416 = sadd.s32 1, %s285
                  %p417 = scmp.ge.s32.totalorder %s416, %s276
                  %s418 = scalar_select %p417, 0, %s416
                  %s419 = smul.u32 %s418, 256
                  %s420 = smul.u32 %s418, 256
                  %s421 = scalar_lea.vmem %s245, %s419
                  %s422 = scalar_lea.vmem %s237, %s420 [#allocation2]
                $region72: #{model_actor_forward_fm.1} parent=66 // loop_footer
                  %s282 = sadd.s32 %s280, 1
                $region73: #{model_actor_forward_fm.1} parent=66 // loop_footer_branch
                  %279 = sbr.rel target = $region69
                $region74: #{model_actor_forward_fm.1} parent=66 // loop_exit
                  _
                %s423 = sshrl.u32 %s275, 5
                %s424 = sand.u32 %s275, 31
                %s425 = smul.u32 %s423, 32
                %s426 = smul.u32 128, %s425
                %s427 = sshra.s32 %s426, 4
                %s428 = scalar_lea.vmem %s245, %s427
                %s429 = smul.u32 128, %s425
                %s430 = sshra.s32 %s429, 4
                %s431 = scalar_lea.vmem %s237, %s430 [#allocation2]
                // While loop
                $region75: #{model_actor_forward_fm.1} parent=66 // loop_pre_header
                  _
                $region76: #{model_actor_forward_fm.1} parent=66 // loop_header
                  %s435 = sphi 0, %s437
                  %p436 = scmp.ge.s32.totalorder %s435, %s424
                  %s440 = sphi 0, %s449
                  %s441 = sphi %s428, %s452
                  %s442 = sphi %s431, %s453
                $region77: #{model_actor_forward_fm.1} parent=66 // loop_header_branch
                  %439 = sbr.rel (%p436) target = $region81
                $region78: #{model_actor_forward_fm.1} parent=66 // loop_body
                  %v443 = vld [vmem:[%s441] sm:$0xff]
                  %444 = vst [vmem:[%s442] sm:$0xff] %v443
                  %v445 = vld [vmem:[%s441 + $0x18] sm:$0xff]
                  %446 = vst [vmem:[%s442 + $0x10] sm:$0xff] %v445
                  %s447 = sadd.s32 1, %s440
                  %p448 = scmp.ge.s32.totalorder %s447, %s424
                  %s449 = scalar_select %p448, 0, %s447
                  %s450 = smul.u32 %s449, 8
                  %s451 = smul.u32 %s449, 8
                  %s452 = scalar_lea.vmem %s428, %s450
                  %s453 = scalar_lea.vmem %s431, %s451 [#allocation2]
                $region79: #{model_actor_forward_fm.1} parent=66 // loop_footer
                  %s437 = sadd.s32 %s435, 1
                $region80: #{model_actor_forward_fm.1} parent=66 // loop_footer_branch
                  %434 = sbr.rel target = $region76
                $region81: #{model_actor_forward_fm.1} parent=66 // loop_exit
                  _
              $region67: #{model_actor_forward_fm.1} parent=51 // pred_fallthru
                _
              %p454 = pneg %p271
              // Predicated region
              $region82: #{model_actor_forward_fm.1} parent=51 // pred_check
                _
              $region83: #{model_actor_forward_fm.1} parent=51 // pred_check_branch
                %456 = sbr.rel (%p271) target = $region85
              $region84: #{model_actor_forward_fm.1} parent=51 // pred_region
                %s457 = sand.u32 %s246, 7
                %s458 = ssub.s32 %s246, %s457
                %s459 = scalar_lea.vmem %s245, %s458
                %s460 = ssub.s32 %s246, %s457
                %s461 = scalar_lea.vmem %s237, %s460 [#allocation2]
                %s462 = sshrl.u32 %s246, 3
                %s463 = sshrl.u32 %s462, 5
                // While loop
                $region86: #{model_actor_forward_fm.1} parent=84 // loop_pre_header
                  _
                $region87: #{model_actor_forward_fm.1} parent=84 // loop_header
                  %s467 = sphi 0, %s469
                  %p468 = scmp.ge.s32.totalorder %s467, %s463
                  %s472 = sphi 0, %s605
                  %s473 = sphi %s245, %s608
                  %s474 = sphi %s237, %s609
                $region88: #{model_actor_forward_fm.1} parent=84 // loop_header_branch
                  %471 = sbr.rel (%p468) target = $region92
                $region89: #{model_actor_forward_fm.1} parent=84 // loop_body
                  %v475 = vld [vmem:[%s473] sm:$0xff]
                  %476 = vst [vmem:[%s474] sm:$0xff] %v475
                  %v477 = vld [vmem:[%s473 + $0x8] sm:$0xff]
                  %478 = vst [vmem:[%s474 + $0x8] sm:$0xff] %v477
                  %v479 = vld [vmem:[%s473 + $0x10] sm:$0xff]
                  %480 = vst [vmem:[%s474 + $0x10] sm:$0xff] %v479
                  %v481 = vld [vmem:[%s473 + $0x18] sm:$0xff]
                  %482 = vst [vmem:[%s474 + $0x18] sm:$0xff] %v481
                  %v483 = vld [vmem:[%s473 + $0x20] sm:$0xff]
                  %484 = vst [vmem:[%s474 + $0x20] sm:$0xff] %v483
                  %v485 = vld [vmem:[%s473 + $0x28] sm:$0xff]
                  %486 = vst [vmem:[%s474 + $0x28] sm:$0xff] %v485
                  %v487 = vld [vmem:[%s473 + $0x30] sm:$0xff]
                  %488 = vst [vmem:[%s474 + $0x30] sm:$0xff] %v487
                  %v489 = vld [vmem:[%s473 + $0x38] sm:$0xff]
                  %490 = vst [vmem:[%s474 + $0x38] sm:$0xff] %v489
                  %v491 = vld [vmem:[%s473 + $0x40] sm:$0xff]
                  %492 = vst [vmem:[%s474 + $0x40] sm:$0xff] %v491
                  %v493 = vld [vmem:[%s473 + $0x48] sm:$0xff]
                  %494 = vst [vmem:[%s474 + $0x48] sm:$0xff] %v493
                  %v495 = vld [vmem:[%s473 + $0x50] sm:$0xff]
                  %496 = vst [vmem:[%s474 + $0x50] sm:$0xff] %v495
                  %v497 = vld [vmem:[%s473 + $0x58] sm:$0xff]
                  %498 = vst [vmem:[%s474 + $0x58] sm:$0xff] %v497
                  %v499 = vld [vmem:[%s473 + $0x60] sm:$0xff]
                  %500 = vst [vmem:[%s474 + $0x60] sm:$0xff] %v499
                  %v501 = vld [vmem:[%s473 + $0x68] sm:$0xff]
                  %502 = vst [vmem:[%s474 + $0x68] sm:$0xff] %v501
                  %v503 = vld [vmem:[%s473 + $0x70] sm:$0xff]
                  %504 = vst [vmem:[%s474 + $0x70] sm:$0xff] %v503
                  %v505 = vld [vmem:[%s473 + $0x78] sm:$0xff]
                  %506 = vst [vmem:[%s474 + $0x78] sm:$0xff] %v505
                  %v507 = vld [vmem:[%s473 + $0x80] sm:$0xff]
                  %508 = vst [vmem:[%s474 + $0x80] sm:$0xff] %v507
                  %v509 = vld [vmem:[%s473 + $0x88] sm:$0xff]
                  %510 = vst [vmem:[%s474 + $0x88] sm:$0xff] %v509
                  %v511 = vld [vmem:[%s473 + $0x90] sm:$0xff]
                  %512 = vst [vmem:[%s474 + $0x90] sm:$0xff] %v511
                  %v513 = vld [vmem:[%s473 + $0x98] sm:$0xff]
                  %514 = vst [vmem:[%s474 + $0x98] sm:$0xff] %v513
                  %v515 = vld [vmem:[%s473 + $0xa0] sm:$0xff]
                  %516 = vst [vmem:[%s474 + $0xa0] sm:$0xff] %v515
                  %v517 = vld [vmem:[%s473 + $0xa8] sm:$0xff]
                  %518 = vst [vmem:[%s474 + $0xa8] sm:$0xff] %v517
                  %v519 = vld [vmem:[%s473 + $0xb0] sm:$0xff]
                  %520 = vst [vmem:[%s474 + $0xb0] sm:$0xff] %v519
                  %v521 = vld [vmem:[%s473 + $0xb8] sm:$0xff]
                  %522 = vst [vmem:[%s474 + $0xb8] sm:$0xff] %v521
                  %v523 = vld [vmem:[%s473 + $0xc0] sm:$0xff]
                  %524 = vst [vmem:[%s474 + $0xc0] sm:$0xff] %v523
                  %v525 = vld [vmem:[%s473 + $0xc8] sm:$0xff]
                  %526 = vst [vmem:[%s474 + $0xc8] sm:$0xff] %v525
                  %v527 = vld [vmem:[%s473 + $0xd0] sm:$0xff]
                  %528 = vst [vmem:[%s474 + $0xd0] sm:$0xff] %v527
                  %v529 = vld [vmem:[%s473 + $0xd8] sm:$0xff]
                  %530 = vst [vmem:[%s474 + $0xd8] sm:$0xff] %v529
                  %v531 = vld [vmem:[%s473 + $0xe0] sm:$0xff]
                  %532 = vst [vmem:[%s474 + $0xe0] sm:$0xff] %v531
                  %v533 = vld [vmem:[%s473 + $0xe8] sm:$0xff]
                  %534 = vst [vmem:[%s474 + $0xe8] sm:$0xff] %v533
                  %v535 = vld [vmem:[%s473 + $0xf0] sm:$0xff]
                  %536 = vst [vmem:[%s474 + $0xf0] sm:$0xff] %v535
                  %v537 = vld [vmem:[%s473 + $0xf8] sm:$0xff]
                  %538 = vst [vmem:[%s474 + $0xf8] sm:$0xff] %v537
                  %v539 = vld [vmem:[%s473 + $0x18] sm:$0xff]
                  %540 = vst [vmem:[%s474 + $0x10] sm:$0xff] %v539
                  %v541 = vld [vmem:[%s473 + $0x20] sm:$0xff]
                  %542 = vst [vmem:[%s474 + $0x18] sm:$0xff] %v541
                  %v543 = vld [vmem:[%s473 + $0x28] sm:$0xff]
                  %544 = vst [vmem:[%s474 + $0x20] sm:$0xff] %v543
                  %v545 = vld [vmem:[%s473 + $0x30] sm:$0xff]
                  %546 = vst [vmem:[%s474 + $0x28] sm:$0xff] %v545
                  %v547 = vld [vmem:[%s473 + $0x38] sm:$0xff]
                  %548 = vst [vmem:[%s474 + $0x30] sm:$0xff] %v547
                  %v549 = vld [vmem:[%s473 + $0x40] sm:$0xff]
                  %550 = vst [vmem:[%s474 + $0x38] sm:$0xff] %v549
                  %v551 = vld [vmem:[%s473 + $0x48] sm:$0xff]
                  %552 = vst [vmem:[%s474 + $0x40] sm:$0xff] %v551
                  %v553 = vld [vmem:[%s473 + $0x50] sm:$0xff]
                  %554 = vst [vmem:[%s474 + $0x48] sm:$0xff] %v553
                  %v555 = vld [vmem:[%s473 + $0x58] sm:$0xff]
                  %556 = vst [vmem:[%s474 + $0x50] sm:$0xff] %v555
                  %v557 = vld [vmem:[%s473 + $0x60] sm:$0xff]
                  %558 = vst [vmem:[%s474 + $0x58] sm:$0xff] %v557
                  %v559 = vld [vmem:[%s473 + $0x68] sm:$0xff]
                  %560 = vst [vmem:[%s474 + $0x60] sm:$0xff] %v559
                  %v561 = vld [vmem:[%s473 + $0x70] sm:$0xff]
                  %562 = vst [vmem:[%s474 + $0x68] sm:$0xff] %v561
                  %v563 = vld [vmem:[%s473 + $0x78] sm:$0xff]
                  %564 = vst [vmem:[%s474 + $0x70] sm:$0xff] %v563
                  %v565 = vld [vmem:[%s473 + $0x80] sm:$0xff]
                  %566 = vst [vmem:[%s474 + $0x78] sm:$0xff] %v565
                  %v567 = vld [vmem:[%s473 + $0x88] sm:$0xff]
                  %568 = vst [vmem:[%s474 + $0x80] sm:$0xff] %v567
                  %v569 = vld [vmem:[%s473 + $0x90] sm:$0xff]
                  %570 = vst [vmem:[%s474 + $0x88] sm:$0xff] %v569
                  %v571 = vld [vmem:[%s473 + $0x98] sm:$0xff]
                  %572 = vst [vmem:[%s474 + $0x90] sm:$0xff] %v571
                  %v573 = vld [vmem:[%s473 + $0xa0] sm:$0xff]
                  %574 = vst [vmem:[%s474 + $0x98] sm:$0xff] %v573
                  %v575 = vld [vmem:[%s473 + $0xa8] sm:$0xff]
                  %576 = vst [vmem:[%s474 + $0xa0] sm:$0xff] %v575
                  %v577 = vld [vmem:[%s473 + $0xb0] sm:$0xff]
                  %578 = vst [vmem:[%s474 + $0xa8] sm:$0xff] %v577
                  %v579 = vld [vmem:[%s473 + $0xb8] sm:$0xff]
                  %580 = vst [vmem:[%s474 + $0xb0] sm:$0xff] %v579
                  %v581 = vld [vmem:[%s473 + $0xc0] sm:$0xff]
                  %582 = vst [vmem:[%s474 + $0xb8] sm:$0xff] %v581
                  %v583 = vld [vmem:[%s473 + $0xc8] sm:$0xff]
                  %584 = vst [vmem:[%s474 + $0xc0] sm:$0xff] %v583
                  %v585 = vld [vmem:[%s473 + $0xd0] sm:$0xff]
                  %586 = vst [vmem:[%s474 + $0xc8] sm:$0xff] %v585
                  %v587 = vld [vmem:[%s473 + $0xd8] sm:$0xff]
                  %588 = vst [vmem:[%s474 + $0xd0] sm:$0xff] %v587
                  %v589 = vld [vmem:[%s473 + $0xe0] sm:$0xff]
                  %590 = vst [vmem:[%s474 + $0xd8] sm:$0xff] %v589
                  %v591 = vld [vmem:[%s473 + $0xe8] sm:$0xff]
                  %592 = vst [vmem:[%s474 + $0xe0] sm:$0xff] %v591
                  %v593 = vld [vmem:[%s473 + $0xf0] sm:$0xff]
                  %594 = vst [vmem:[%s474 + $0xe8] sm:$0xff] %v593
                  %v595 = vld [vmem:[%s473 + $0xf8] sm:$0xff]
                  %596 = vst [vmem:[%s474 + $0xf0] sm:$0xff] %v595
                  %v597 = vld [vmem:[%s473 + $0x100] sm:$0xff]
                  %598 = vst [vmem:[%s474 + $0xf8] sm:$0xff] %v597
                  %v599 = vld [vmem:[%s473 + $0x108] sm:$0xff]
                  %600 = vst [vmem:[%s474 + $0x100] sm:$0xff] %v599
                  %v601 = vld [vmem:[%s473 + $0x110] sm:$0xff]
                  %602 = vst [vmem:[%s474 + $0x108] sm:$0xff] %v601
                  %s603 = sadd.s32 1, %s472
                  %p604 = scmp.ge.s32.totalorder %s603, %s463
                  %s605 = scalar_select %p604, 0, %s603
                  %s606 = smul.u32 %s605, 256
                  %s607 = smul.u32 %s605, 256
                  %s608 = scalar_lea.vmem %s245, %s606
                  %s609 = scalar_lea.vmem %s237, %s607 [#allocation2]
                $region90: #{model_actor_forward_fm.1} parent=84 // loop_footer
                  %s469 = sadd.s32 %s467, 1
                $region91: #{model_actor_forward_fm.1} parent=84 // loop_footer_branch
                  %466 = sbr.rel target = $region87
                $region92: #{model_actor_forward_fm.1} parent=84 // loop_exit
                  _
                %s610 = sshrl.u32 %s462, 5
                %s611 = sand.u32 %s462, 31
                %s612 = smul.u32 %s610, 32
                %s613 = smul.u32 128, %s612
                %s614 = sshra.s32 %s613, 4
                %s615 = scalar_lea.vmem %s245, %s614
                %s616 = smul.u32 128, %s612
                %s617 = sshra.s32 %s616, 4
                %s618 = scalar_lea.vmem %s237, %s617 [#allocation2]
                // While loop
                $region93: #{model_actor_forward_fm.1} parent=84 // loop_pre_header
                  _
                $region94: #{model_actor_forward_fm.1} parent=84 // loop_header
                  %s622 = sphi 0, %s624
                  %p623 = scmp.ge.s32.totalorder %s622, %s611
                  %s627 = sphi 0, %s636
                  %s628 = sphi %s615, %s639
                  %s629 = sphi %s618, %s640
                $region95: #{model_actor_forward_fm.1} parent=84 // loop_header_branch
                  %626 = sbr.rel (%p623) target = $region99
                $region96: #{model_actor_forward_fm.1} parent=84 // loop_body
                  %v630 = vld [vmem:[%s628] sm:$0xff]
                  %631 = vst [vmem:[%s629] sm:$0xff] %v630
                  %v632 = vld [vmem:[%s628 + $0x18] sm:$0xff]
                  %633 = vst [vmem:[%s629 + $0x10] sm:$0xff] %v632
                  %s634 = sadd.s32 1, %s627
                  %p635 = scmp.ge.s32.totalorder %s634, %s611
                  %s636 = scalar_select %p635, 0, %s634
                  %s637 = smul.u32 %s636, 8
                  %s638 = smul.u32 %s636, 8
                  %s639 = scalar_lea.vmem %s615, %s637
                  %s640 = scalar_lea.vmem %s618, %s638 [#allocation2]
                $region97: #{model_actor_forward_fm.1} parent=84 // loop_footer
                  %s624 = sadd.s32 %s622, 1
                $region98: #{model_actor_forward_fm.1} parent=84 // loop_footer_branch
                  %621 = sbr.rel target = $region94
                $region99: #{model_actor_forward_fm.1} parent=84 // loop_exit
                  _
                %s641 = sshllo.u32 0, %s457
                loop: start=0, step=1, limit=1
                $region100: #{model_actor_forward_fm.1} parent=84 // loop_pre_header
                  _
                $region101: #{model_actor_forward_fm.1} parent=84 // loop_header
                  %s643 = sphi 0, %s647
                  %p644 = scmp.ge.s32.totalorder %s643, 1
                  %s648 = sphi %s459, %s459
                  %s649 = sphi %s461, %s461
                $region102: #{model_actor_forward_fm.1} parent=84 // loop_header_branch
                  %646 = sbr.rel (%p644) target = $region106
                $region103: #{model_actor_forward_fm.1} parent=84 // loop_body
                  %v650 = vld [vmem:[%s648] sm:%s641]
                  %651 = vst [vmem:[%s649] sm:%s641] %v650
                  %v652 = vld [vmem:[%s648 + $0x18] sm:%s641]
                  %653 = vst [vmem:[%s649 + $0x10] sm:%s641] %v652
                $region104: #{model_actor_forward_fm.1} parent=84 // loop_footer
                  %s647 = sadd.s32 1, %s643
                $region105: #{model_actor_forward_fm.1} parent=84 // loop_footer_branch
                  %642 = sbr.rel target = $region101
                $region106: #{model_actor_forward_fm.1} parent=84 // loop_exit
                  _
              $region85: #{model_actor_forward_fm.1} parent=51 // pred_fallthru
                _
            $region52: #{model_actor_forward_fm.1} parent=47 // pred_fallthru
              _
            // Predicated region
            $region53: #{model_actor_forward_fm.1} parent=47 // pred_check
              %p254 = pneg %p250
            $region54: #{model_actor_forward_fm.1} parent=47 // pred_check_branch
              %256 = sbr.rel (%p254) target = $region56
            $region55: #{model_actor_forward_fm.1} parent=47 // pred_region
              %s257 = sshllo.u32 0, %s246
              loop: start=0, step=1, limit=1
              $region57: #{model_actor_forward_fm.1} parent=55 // loop_pre_header
                _
              $region58: #{model_actor_forward_fm.1} parent=55 // loop_header
                %s259 = sphi 0, %s263
                %p260 = scmp.ge.s32.totalorder %s259, 1
                %s264 = sphi %s245, %s245
                %s265 = sphi %s237, %s237
              $region59: #{model_actor_forward_fm.1} parent=55 // loop_header_branch
                %262 = sbr.rel (%p260) target = $region63
              $region60: #{model_actor_forward_fm.1} parent=55 // loop_body
                %v266 = vld [vmem:[%s264] sm:%s257]
                %267 = vst [vmem:[%s265] sm:%s257] %v266
                %v268 = vld [vmem:[%s264 + $0x18] sm:%s257]
                %269 = vst [vmem:[%s265 + $0x10] sm:%s257] %v268
              $region61: #{model_actor_forward_fm.1} parent=55 // loop_footer
                %s263 = sadd.s32 1, %s259
              $region62: #{model_actor_forward_fm.1} parent=55 // loop_footer_branch
                %258 = sbr.rel target = $region58
              $region63: #{model_actor_forward_fm.1} parent=55 // loop_exit
                _
            $region56: #{model_actor_forward_fm.1} parent=47 // pred_fallthru
              _
          $region48: #{model_actor_forward_fm.1} parent=43 // pred_fallthru
            _
          %654 = vnop
        $region44: #{model_actor_forward_fm.1} parent=39 // pred_fallthru
          _
      $region40: #{model_actor_forward_fm.1} parent=5 // pred_fallthru
        _
      %p655 = scmp.le.s32.totalorder 1, %s16
      %p656 = scmp.lt.s32.totalorder %s16, 3
      %p657 = pnand %p655, %p656
      %p658 = pneg %p657
      // Predicated region
      $region107: #{model_actor_forward_fm.1} parent=5 // pred_check
        _
      $region108: #{model_actor_forward_fm.1} parent=5 // pred_check_branch
        %660 = sbr.rel (%p657) target = $region110
      $region109: #{model_actor_forward_fm.1} parent=5 // pred_region
        %s661 = ssub.s32 %s16, 1
        %s662 = sand.u32 %s29, 1
        %s663 = sand.u32 %s29, 1
        %s664 = smul.addr %s663, 32
        %s665 = scalar_lea.vmem [#allocation2], %s664
        // Predicated region
        $region111: #{model_actor_forward_fm.1} parent=109 // pred_check
          %p666 = pneg %p42
        $region112: #{model_actor_forward_fm.1} parent=109 // pred_check_branch
          %668 = sbr.rel (%p666) target = $region114
        $region113: #{model_actor_forward_fm.1} parent=109 // pred_region
          _
        $region114: #{model_actor_forward_fm.1} parent=109 // pred_fallthru
          _
        %s669 = sand.u32 %s29, 1
        %s670 = sand.u32 %s29, 1
        %s671 = smul.addr %s670, 32
        %s672 = scalar_lea.vmem [#allocation2], %s671
        %p673 = pneg %p42
        %p674 = pneg %p39
        %p675 = pneg %p63
        %p676 = pneg %p60
        %p677 = pneg %p84
        %p678 = pneg %p81
        %p679 = pneg %p105
        %p680 = pneg %p102
        %p681 = pneg %p126
        %p682 = pneg %p123
        %p683 = pneg %p147
        %p684 = pneg %p144
        %p685 = pneg %p168
        %p686 = pneg %p165
        %p687 = pneg %p194
        %p688 = pneg %p191
        %s689 = sand.u32 %s181, 1
        %s690 = scalar_lea.sflag [#allocation4], %s689
        %s691 = sand.u32 %s181, 1
        %s692 = smul.addr %s691, 32
        %s693 = scalar_lea.vmem [#allocation3], %s692
        %s694 = smul.u32 2, %s21
        %s695 = ssub.s32 3, %s694
        %p696 = scmp.lt.s32.totalorder %s695, 2
        %s697 = scalar_select %p696, %s695, 2
        %s698 = smul.u32 256, %s697
        %s699 = smul.u32 2, %s21
        %s700 = ssub.s32 3, %s699
        %p701 = scmp.lt.s32.totalorder %s700, 2
        %s702 = scalar_select %p701, %s700, 2
        %s703 = smul.u32 256, %s702
        %v705 = vld [vmem:[%s665] sm:$0xff]
        %v706 = vld [vmem:[%s665 + $0x8] sm:$0xff]
        %v707 = vld [vmem:[%s665 + $0x10] sm:$0x1f]
        %v708 = vld [vmem:[%s665 + $0x18] sm:$0x1f]
        %v709 = vpack.c.bf16 %v707, %v705
        %v710 = vpack.c.bf16 %v708, %v706
        %v711 = vld [vmem:[%s1] sm:$0xff]
        %v712 = vld [vmem:[%s1 + $0x8] sm:$0xff]
        %v713 = vld [vmem:[%s1 + $0x10] sm:$0xff]
        %v714 = vld [vmem:[%s1 + $0x18] sm:$0xff]
        %v715 = vpack.c.bf16 %v712, %v711
        %v716 = vpack.c.bf16 %v714, %v713
        %v717 = vld [vmem:[%s2] sm:$0xff]
        %v718 = vld [vmem:[%s2 + $0x8] sm:$0xff]
        %v719 = vld [vmem:[%s2 + $0x10] sm:$0xff]
        %v720 = vld [vmem:[%s2 + $0x18] sm:$0xff]
        %722 = vset.pattern.permute.xlu0 0
        %723 = vperm.xlu0 %722, %v717
        %v724 = vpop.permute.xlu0 %723
        %727 = vset.pattern.permute.xlu0 0
        %728 = vperm.xlu0 %727, %v718
        %v729 = vpop.permute.xlu0 %728
        %732 = vset.pattern.permute.xlu0 0
        %733 = vperm.xlu0 %732, %v719
        %v734 = vpop.permute.xlu0 %733
        %737 = vset.pattern.permute.xlu0 0
        %738 = vperm.xlu0 %737, %v720
        %v739 = vpop.permute.xlu0 %738
        %vm741 = vcmask 105472
        %v743 = vsel %vm741, %v715, 0
        %v746 = vsel %vm741, %v716, 0
        %vm748 = vcmask 1045504
        %vm749 = vcmask 1046528
        %v750 = vsel %vm748, 4294967295, 65535
        %v751 = vsel %vm749, %v750, 0
        %v753 = vand.u32 %v709, %v751
        %v756 = vand.u32 %v710, %v751
        %758 = vmatprep.subr.bf16.mxu0 %v756
        %759 = vmatpush1.bf16.msra.mxu0 %v753
        %760 = vmatprep.subr.bf16.mxu0 0
        %761 = vmatpush1.bf16.msra.mxu0 0
        %762 = vmatprep.subr.bf16.mxu0 0
        %763 = vmatpush1.bf16.msra.mxu0 0
        %764 = vmatprep.subr.bf16.mxu0 0
        %765 = vmatpush1.bf16.msra.mxu0 0
        %766 = vmatprep.subr.bf16.mxu0 0
        %767 = vmatpush1.bf16.msra.mxu0 0
        %768 = vmatprep.subr.bf16.mxu0 0
        %769 = vmatpush1.bf16.msra.mxu0 0
        %770 = vmatprep.subr.bf16.mxu0 0
        %771 = vmatpush1.bf16.msra.mxu0 0
        %772 = vmatprep.subr.bf16.mxu0 0
        %773 = vmatpush1.bf16.msra.mxu0 0
        %774 = vmatprep.subr.bf16.mxu0 0
        %775 = vmatpush1.bf16.msra.mxu0 0
        %776 = vmatprep.subr.bf16.mxu0 0
        %777 = vmatpush1.bf16.msra.mxu0 0
        %778 = vmatprep.subr.bf16.mxu0 0
        %779 = vmatpush1.bf16.msra.mxu0 0
        %780 = vmatprep.subr.bf16.mxu0 0
        %781 = vmatpush1.bf16.msra.mxu0 0
        %782 = vmatprep.subr.bf16.mxu0 0
        %783 = vmatpush1.bf16.msra.mxu0 0
        %784 = vmatprep.subr.bf16.mxu0 0
        %785 = vmatpush1.bf16.msra.mxu0 0
        %786 = vmatprep.subr.bf16.mxu0 0
        %787 = vmatpush1.bf16.msra.mxu0 0
        %788 = vmatprep.subr.bf16.mxu0 0
        %789 = vmatpush1.bf16.msra.mxu0 0
        %790 = vmatprep.mubr.bf16.mxu0 0
        %791 = vmatmul.mubr.bf16.gmra.mrb[0].mxu0 %v743
        %v792 = vpop.f32.mrb[0].mxu0
        %v793 = vadd.f32 %v724, %v792
        %v794 = vpop.f32.mrb[0].mxu0
        %v795 = vadd.f32 %v724, %v794
        %v796 = vpop.f32.mrb[0].mxu0
        %v797 = vadd.f32 %v729, %v796
        %v798 = vpop.f32.mrb[0].mxu0
        %v799 = vadd.f32 %v729, %v798
        %800 = vmatprep.mubr.bf16.mxu0 0
        %801 = vmatmul.mubr.bf16.gmra.mrb[0].mxu0 %v746
        %v802 = vpop.f32.mrb[0].mxu0
        %v803 = vadd.f32 %v734, %v802
        %v804 = vpop.f32.mrb[0].mxu0
        %v805 = vadd.f32 %v734, %v804
        %v806 = vpop.f32.mrb[0].mxu0
        %v807 = vadd.f32 %v739, %v806
        %v808 = vpop.f32.mrb[0].mxu0
        %v809 = vadd.f32 %v739, %v808
        %810 = vdwg.mxu0
        %v811 = vmax.f32 %v793, 0.0
        %v812 = vmax.f32 %v795, 0.0
        %v813 = vmax.f32 %v797, 0.0
        %v814 = vmax.f32 %v799, 0.0
        %v815 = vmax.f32 %v803, 0.0
        %v816 = vmax.f32 %v805, 0.0
        %v817 = vmax.f32 %v807, 0.0
        %v818 = vmax.f32 %v809, 0.0
        %v819 = vpack.c.bf16 %v813, %v811
        %v820 = vpack.c.bf16 %v814, %v812
        %v821 = vpack.c.bf16 %v817, %v815
        %v822 = vpack.c.bf16 %v818, %v816
        %v823 = vld [vmem:[%s3] sm:$0xff]
        %v824 = vld [vmem:[%s3 + $0x8] sm:$0xff]
        %v825 = vld [vmem:[%s3 + $0x10] sm:$0xff]
        %v826 = vld [vmem:[%s3 + $0x18] sm:$0xff]
        %v827 = vpack.c.bf16 %v824, %v823
        %v828 = vpack.c.bf16 %v826, %v825
        %v829 = vld [vmem:[%s4] sm:$0xff]
        %v830 = vld [vmem:[%s4 + $0x8] sm:$0xff]
        %v831 = vld [vmem:[%s4 + $0x10] sm:$0xff]
        %v832 = vld [vmem:[%s4 + $0x18] sm:$0xff]
        %834 = vset.pattern.permute.xlu0 0
        %835 = vperm.xlu0 %834, %v829
        %v836 = vpop.permute.xlu0 %835
        %839 = vset.pattern.permute.xlu0 0
        %840 = vperm.xlu0 %839, %v830
        %v841 = vpop.permute.xlu0 %840
        %844 = vset.pattern.permute.xlu0 0
        %845 = vperm.xlu0 %844, %v831
        %v846 = vpop.permute.xlu0 %845
        %849 = vset.pattern.permute.xlu0 0
        %850 = vperm.xlu0 %849, %v832
        %v851 = vpop.permute.xlu0 %850
        %vm853 = vcmask 261120
        %v855 = vsel %vm853, %v827, 0
        %v858 = vsel %vm853, %v828, 0
        %860 = vmatprep.subr.bf16.mxu0 %v820
        %861 = vmatpush1.bf16.msra.mxu0 %v819
        %862 = vmatprep.subr.bf16.mxu0 %v822
        %863 = vmatpush1.bf16.msra.mxu0 %v821
        %864 = vmatprep.subr.bf16.mxu0 0
        %865 = vmatpush1.bf16.msra.mxu0 0
        %866 = vmatprep.subr.bf16.mxu0 0
        %867 = vmatpush1.bf16.msra.mxu0 0
        %868 = vmatprep.subr.bf16.mxu0 0
        %869 = vmatpush1.bf16.msra.mxu0 0
        %870 = vmatprep.subr.bf16.mxu0 0
        %871 = vmatpush1.bf16.msra.mxu0 0
        %872 = vmatprep.subr.bf16.mxu0 0
        %873 = vmatpush1.bf16.msra.mxu0 0
        %874 = vmatprep.subr.bf16.mxu0 0
        %875 = vmatpush1.bf16.msra.mxu0 0
        %876 = vmatprep.subr.bf16.mxu0 0
        %877 = vmatpush1.bf16.msra.mxu0 0
        %878 = vmatprep.subr.bf16.mxu0 0
        %879 = vmatpush1.bf16.msra.mxu0 0
        %880 = vmatprep.subr.bf16.mxu0 0
        %881 = vmatpush1.bf16.msra.mxu0 0
        %882 = vmatprep.subr.bf16.mxu0 0
        %883 = vmatpush1.bf16.msra.mxu0 0
        %884 = vmatprep.subr.bf16.mxu0 0
        %885 = vmatpush1.bf16.msra.mxu0 0
        %886 = vmatprep.subr.bf16.mxu0 0
        %887 = vmatpush1.bf16.msra.mxu0 0
        %888 = vmatprep.subr.bf16.mxu0 0
        %889 = vmatpush1.bf16.msra.mxu0 0
        %890 = vmatprep.subr.bf16.mxu0 0
        %891 = vmatpush1.bf16.msra.mxu0 0
        %892 = vmatprep.mubr.bf16.mxu0 0
        %893 = vmatmul.mubr.bf16.gmra.mrb[0].mxu0 %v855
        %v894 = vpop.f32.mrb[0].mxu0
        %v895 = vadd.f32 %v836, %v894
        %v896 = vpop.f32.mrb[0].mxu0
        %v897 = vadd.f32 %v836, %v896
        %v898 = vpop.f32.mrb[0].mxu0
        %v899 = vadd.f32 %v841, %v898
        %v900 = vpop.f32.mrb[0].mxu0
        %v901 = vadd.f32 %v841, %v900
        %902 = vmatprep.mubr.bf16.mxu0 0
        %903 = vmatmul.mubr.bf16.gmra.mrb[0].mxu0 %v858
        %v904 = vpop.f32.mrb[0].mxu0
        %v905 = vadd.f32 %v846, %v904
        %v906 = vpop.f32.mrb[0].mxu0
        %v907 = vadd.f32 %v846, %v906
        %v908 = vpop.f32.mrb[0].mxu0
        %v909 = vadd.f32 %v851, %v908
        %v910 = vpop.f32.mrb[0].mxu0
        %v911 = vadd.f32 %v851, %v910
        %912 = vdwg.mxu0
        %v913 = vmax.f32 %v895, 0.0
        %v914 = vmax.f32 %v897, 0.0
        %v915 = vmax.f32 %v899, 0.0
        %v916 = vmax.f32 %v901, 0.0
        %v917 = vmax.f32 %v905, 0.0
        %v918 = vmax.f32 %v907, 0.0
        %v919 = vmax.f32 %v909, 0.0
        %v920 = vmax.f32 %v911, 0.0
        %v921 = vpack.c.bf16 %v915, %v913
        %v922 = vpack.c.bf16 %v916, %v914
        %v923 = vpack.c.bf16 %v919, %v917
        %v924 = vpack.c.bf16 %v920, %v918
        %v925 = vld [vmem:[%s5] sm:$0xff]
        %v926 = vld [vmem:[%s5 + $0x8] sm:$0x1]
        %v927 = vpack.c.bf16 %v926, %v925
        %v928 = vld [vmem:[%s6] sm:$0xff]
        %v929 = vld [vmem:[%s6 + $0x8] sm:$0x1]
        %931 = vset.pattern.permute.xlu0 0
        %932 = vperm.xlu0 %931, %v928
        %v933 = vpop.permute.xlu0 %932
        %936 = vset.pattern.permute.xlu0 0
        %937 = vperm.xlu0 %936, %v929
        %v938 = vpop.permute.xlu0 %937
        %v941 = vsel %vm853, %v927, 0
        %943 = vmatprep.subr.bf16.mxu0 %v922
        %944 = vmatpush1.bf16.msra.mxu0 %v921
        %945 = vmatprep.subr.bf16.mxu0 %v924
        %946 = vmatpush1.bf16.msra.mxu0 %v923
        %947 = vmatprep.subr.bf16.mxu0 0
        %948 = vmatpush1.bf16.msra.mxu0 0
        %949 = vmatprep.subr.bf16.mxu0 0
        %950 = vmatpush1.bf16.msra.mxu0 0
        %951 = vmatprep.subr.bf16.mxu0 0
        %952 = vmatpush1.bf16.msra.mxu0 0
        %953 = vmatprep.subr.bf16.mxu0 0
        %954 = vmatpush1.bf16.msra.mxu0 0
        %955 = vmatprep.subr.bf16.mxu0 0
        %956 = vmatpush1.bf16.msra.mxu0 0
        %957 = vmatprep.subr.bf16.mxu0 0
        %958 = vmatpush1.bf16.msra.mxu0 0
        %959 = vmatprep.subr.bf16.mxu0 0
        %960 = vmatpush1.bf16.msra.mxu0 0
        %961 = vmatprep.subr.bf16.mxu0 0
        %962 = vmatpush1.bf16.msra.mxu0 0
        %963 = vmatprep.subr.bf16.mxu0 0
        %964 = vmatpush1.bf16.msra.mxu0 0
        %965 = vmatprep.subr.bf16.mxu0 0
        %966 = vmatpush1.bf16.msra.mxu0 0
        %967 = vmatprep.subr.bf16.mxu0 0
        %968 = vmatpush1.bf16.msra.mxu0 0
        %969 = vmatprep.subr.bf16.mxu0 0
        %970 = vmatpush1.bf16.msra.mxu0 0
        %971 = vmatprep.subr.bf16.mxu0 0
        %972 = vmatpush1.bf16.msra.mxu0 0
        %973 = vmatprep.subr.bf16.mxu0 0
        %974 = vmatpush1.bf16.msra.mxu0 0
        %975 = vmatprep.mubr.bf16.mxu0 0
        %976 = vmatmul.mubr.bf16.gmra.mrb[0].mxu0 %v941
        %v977 = vpop.f32.mrb[0].mxu0
        %v978 = vadd.f32 %v933, %v977
        %v979 = vpop.f32.mrb[0].mxu0
        %v980 = vadd.f32 %v933, %v979
        %v981 = vpop.f32.mrb[0].mxu0
        %v982 = vadd.f32 %v938, %v981
        %v983 = vpop.f32.mrb[0].mxu0
        %v984 = vadd.f32 %v938, %v983
        %985 = vdwg.mxu0
        %986 = vst [vmem:[%s693] sm:$0xff] %v978
        %987 = vst [vmem:[%s693 + $0x8] sm:$0xff] %v980
        %988 = vst [vmem:[%s693 + $0x10] sm:$0x1] %v982
        %989 = vst [vmem:[%s693 + $0x18] sm:$0x1] %v984
        %s990 = sand.u32 %s181, 1
        %s991 = scalar_lea.sflag [#allocation4], %s990
        %s992 = sand.u32 %s181, 1
        %s993 = smul.addr %s992, 32
        %s994 = scalar_lea.vmem [#allocation3], %s993
        // Predicated region
        $region115: #{model_actor_forward_fm.1} parent=109 // pred_check
          %p995 = pneg %p191
        $region116: #{model_actor_forward_fm.1} parent=109 // pred_check_branch
          %997 = sbr.rel (%p995) target = $region118
        $region117: #{model_actor_forward_fm.1} parent=109 // pred_region
          %s998 = smul.u32 2, %s21
          %s999 = ssub.s32 3, %s998
          %p1000 = scmp.lt.s32.totalorder %s999, 2
          %s1001 = scalar_select %p1000, %s999, 2
          %s1002 = smul.u32 256, %s1001
          %s1004 = ssub.s32 512, %s1002
          %1005 = vsyncadd %s991, %s1004
          %p1006 = scmp.ne.s32.totalorder 0, %s1002
          %s1007 = smul.addr %s998, 128
          %s1008 = scalar_lea.hbm %s7, %s1007
          %s1009 = smul.u32 %s1001, 8
          %s1010 = smul.u32 %s1009, 2
          %s1011 = sshll.u32 %s994, 4
          %s1012 = int_to_ptr.vmem [resolvable:$true] %s1011
          %s1013 = sshll.u32 %s1010, 4
          %1017 = dma.vmem_to_hbm [thread:$0]  (%p1006), %s1012, %s1013, %s1008, %s991, 256, 384, %s1009
        $region118: #{model_actor_forward_fm.1} parent=109 // pred_fallthru
          _
      $region110: #{model_actor_forward_fm.1} parent=5 // pred_fallthru
        _
      %p1018 = scmp.le.s32.totalorder 2, %s16
      // Predicated region
      $region119: #{model_actor_forward_fm.1} parent=5 // pred_check
        %p1019 = pneg %p1018
      $region120: #{model_actor_forward_fm.1} parent=5 // pred_check_branch
        %1021 = sbr.rel (%p1019) target = $region122
      $region121: #{model_actor_forward_fm.1} parent=5 // pred_region
        %s1022 = ssub.s32 %s16, 2
        // Predicated region
        $region123: #{model_actor_forward_fm.1} parent=121 // pred_check
          %p1023 = pneg %p197
        $region124: #{model_actor_forward_fm.1} parent=121 // pred_check_branch
          %1025 = sbr.rel (%p1023) target = $region126
        $region125: #{model_actor_forward_fm.1} parent=121 // pred_region
          %s1026 = sand.u32 %s182, 1
          %s1027 = scalar_lea.sflag [#allocation4], %s1026
          %s1028 = sand.u32 %s182, 1
          %s1029 = smul.addr %s1028, 32
          %s1030 = scalar_lea.vmem [#allocation3], %s1029
          %1031 = dma.done %s1027, 512
        $region126: #{model_actor_forward_fm.1} parent=121 // pred_fallthru
          _
      $region122: #{model_actor_forward_fm.1} parent=5 // pred_fallthru
        _
    $region6: #{model_actor_forward_fm.1} parent=1 // loop_footer
      %s20 = sadd.s32 1, %s16
    $region7: #{model_actor_forward_fm.1} parent=1 // loop_footer_branch
      %15 = sbr.rel target = $region3
    $region8: #{model_actor_forward_fm.1} parent=1 // loop_exit
      _
    %1032 = vsyncpa [#allocation4], 1
    %s1033 = scalar_lea.sflag [#allocation4], 1
    %1034 = vsyncpa %s1033, 1

</llo_original>
